<compile_context>
chip_gen: v7x
topology: tpu7x:2x2x1
jax: 0.10.0
libtpu: 0.0.40
codegen_flags: <defaults>
</compile_context>

<pallas_src>
import jax
import jax.numpy as jnp
from jax.experimental import pallas as pl
from jax.experimental.pallas import tpu as pltpu


def atten_kernel(rnn_ref, enc_ref, w_ref, b_ref, out_ref):
    # rnn_ref: (B, Sr, H)   enc_ref: (B, Se, H)
    # w_ref:   (H, H)  PyTorch Linear weight (out_features, in_features)
    # b_ref:   (1, 1, H)
    # out_ref: (B, Sr, Se)
    B = rnn_ref.shape[0]
    rnn = rnn_ref[...]                                      # (B, Sr, H)
    enc = enc_ref[...]                                      # (B, Se, H)
    w = jnp.broadcast_to(w_ref[...], (B,) + w_ref.shape)    # (B, H, H)

    # Linear: enc @ W.T + b -- contract the shared in_features axis directly
    # (no W.T materialized; MXU batched matmul, batch dim leading).
    enc_proj = jnp.einsum(
        "bkh,boh->bko", enc, w, preferred_element_type=jnp.float32
    ) + b_ref[...]                                          # (B, Se, H)

    # Attention scores: rnn @ enc_proj^T per batch, again contracting last axes
    # (no enc_proj.T materialized).
    scores = jnp.einsum(
        "bqh,bkh->bqk", rnn, enc_proj, preferred_element_type=jnp.float32
    )                                                       # (B, Sr, Se)

    # energies = exp(scores), then numerically-stable log_softmax over last axis.
    energies = jnp.exp(scores)
    m = jnp.max(energies, axis=-1, keepdims=True)
    lse = m + jnp.log(jnp.sum(jnp.exp(energies - m), axis=-1, keepdims=True))
    out_ref[...] = energies - lse


def atten_forward(rnn_outputs, encoder_outputs, weight, bias):
    """rnn_outputs: (Sr, B, H), encoder_outputs: (Se, B, H). Returns (B, Sr, Se)."""
    rnn = jnp.transpose(rnn_outputs, (1, 0, 2)).astype(jnp.float32)      # (B, Sr, H)
    enc = jnp.transpose(encoder_outputs, (1, 0, 2)).astype(jnp.float32)  # (B, Se, H)
    B, Sr, H = rnn.shape
    Se = enc.shape[1]
    bias3d = bias.reshape(1, 1, H).astype(jnp.float32)
    weight = weight.astype(jnp.float32)

    vmem = pltpu.MemorySpace.VMEM
    return pl.pallas_call(
        atten_kernel,
        out_shape=jax.ShapeDtypeStruct((B, Sr, Se), jnp.float32),
        # Single invocation (no grid): everything fits comfortably in VMEM.
        in_specs=[
            pl.BlockSpec(memory_space=vmem),   # rnn  (B, Sr, H)
            pl.BlockSpec(memory_space=vmem),   # enc  (B, Se, H)
            pl.BlockSpec(memory_space=vmem),   # W    (H, H)
            pl.BlockSpec(memory_space=vmem),   # bias (1, 1, H)
        ],
        out_specs=pl.BlockSpec(memory_space=vmem),
    )(rnn, enc, weight, bias3d)


if __name__ == "__main__":
    # Small shapes consistent with the module: hidden=32, batch=2, seq=8
    hidden_size = 32
    batch_size = 2
    seq_r = 8    # decoder (rnn) steps
    seq_e = 8    # encoder steps

    key = jax.random.PRNGKey(0)
    k_rnn, k_enc, k_w, k_b = jax.random.split(key, 4)

    # Inputs in PyTorch's seq-first layout: (S, B, H)
    rnn_outputs = jax.random.normal(k_rnn, (seq_r, batch_size, hidden_size), jnp.float32)
    encoder_outputs = jax.random.normal(k_enc, (seq_e, batch_size, hidden_size), jnp.float32)

    # Deterministic Linear(hidden, hidden) params (PyTorch-style uniform init)
    bound = 1.0 / (hidden_size ** 0.5)
    weight = jax.random.uniform(k_w, (hidden_size, hidden_size), jnp.float32, -bound, bound)
    bias = jax.random.uniform(k_b, (hidden_size,), jnp.float32, -bound, bound)

    out = atten_forward(rnn_outputs, encoder_outputs, weight, bias)
    out = jax.block_until_ready(out)

    # Pure-JAX reference check (faithful to the PyTorch forward)
    rnn_bf = jnp.transpose(rnn_outputs, (1, 0, 2))
    enc_bf = jnp.transpose(encoder_outputs, (1, 0, 2))
    enc_proj = enc_bf @ weight.T + bias
    energies = jnp.exp(jnp.einsum("bqh,bkh->bqk", rnn_bf, enc_proj))
    ref = jax.nn.log_softmax(energies, axis=2)
    assert out.shape == (batch_size, seq_r, seq_e)
    assert jnp.allclose(out, ref, atol=1e-4, rtol=1e-4), "mismatch vs reference"

    print("KERNEL_OK")
</pallas_src>

<mosaic_0001>
module attributes {stable_mosaic.version = 11 : i64} {
  func.func @atten_kernel(%arg0: memref<2x8x32xf32, #tpu.memory_space<vmem>>, %arg1: memref<2x8x32xf32, #tpu.memory_space<vmem>>, %arg2: memref<32x32xf32, #tpu.memory_space<vmem>>, %arg3: memref<1x1x32xf32, #tpu.memory_space<vmem>>, %arg4: memref<2x8x8xf32, #tpu.memory_space<vmem>>) attributes {dimension_semantics = [], scalar_prefetch = 0 : i64, scratch_operands = 0 : i64, tpu.core_type = #tpu.core_type<tc>} {
    %c0 = arith.constant 0 : index
    %c0_0 = arith.constant 0 : index
    %c0_1 = arith.constant 0 : index
    %0 = vector.load %arg0[%c0, %c0_0, %c0_1] : memref<2x8x32xf32, #tpu.memory_space<vmem>>, vector<2x8x32xf32>
    %c0_2 = arith.constant 0 : index
    %c0_3 = arith.constant 0 : index
    %c0_4 = arith.constant 0 : index
    %1 = vector.load %arg1[%c0_2, %c0_3, %c0_4] : memref<2x8x32xf32, #tpu.memory_space<vmem>>, vector<2x8x32xf32>
    %c0_5 = arith.constant 0 : index
    %c0_6 = arith.constant 0 : index
    %2 = vector.load %arg2[%c0_5, %c0_6] : memref<32x32xf32, #tpu.memory_space<vmem>>, vector<32x32xf32>
    %3 = vector.shape_cast %2 : vector<32x32xf32> to vector<1x32x32xf32>
    %4 = vector.broadcast %3 : vector<1x32x32xf32> to vector<2x32x32xf32>
    "tpu.trace_start"() <{level = 10 : i32, message = "bkh,boh->bko"}> : () -> ()
    %cst = arith.constant dense<0.000000e+00> : vector<2x8x32xf32>
    %5 = tpu.matmul %1, %4, %cst {dimension_numbers = #tpu.dot_dimension_numbers<[2], [2], [1], [1], [0, 0, 0, 1, 1, 1], [0], [0]>} : vector<2x8x32xf32>, vector<2x32x32xf32>, vector<2x8x32xf32> -> vector<2x8x32xf32>
    "tpu.trace_stop"() : () -> ()
    %c0_7 = arith.constant 0 : index
    %c0_8 = arith.constant 0 : index
    %c0_9 = arith.constant 0 : index
    %6 = vector.load %arg3[%c0_7, %c0_8, %c0_9] : memref<1x1x32xf32, #tpu.memory_space<vmem>>, vector<1x1x32xf32>
    %7 = vector.broadcast %6 : vector<1x1x32xf32> to vector<2x8x32xf32>
    %8 = arith.addf %5, %7 : vector<2x8x32xf32>
    "tpu.trace_start"() <{level = 10 : i32, message = "bqh,bkh->bqk"}> : () -> ()
    %cst_10 = arith.constant dense<0.000000e+00> : vector<2x8x8xf32>
    %9 = tpu.matmul %0, %8, %cst_10 {dimension_numbers = #tpu.dot_dimension_numbers<[2], [2], [1], [1], [0, 0, 0, 1, 1, 1], [0], [0]>} : vector<2x8x32xf32>, vector<2x8x32xf32>, vector<2x8x8xf32> -> vector<2x8x8xf32>
    "tpu.trace_stop"() : () -> ()
    %10 = math.exp %9 : vector<2x8x8xf32>
    %cst_11 = arith.constant dense<0xFF800000> : vector<2x8xf32>
    %11 = vector.multi_reduction <maximumf>, %10, %cst_11 [2] : vector<2x8x8xf32> to vector<2x8xf32>
    %12 = vector.shape_cast %11 : vector<2x8xf32> to vector<2x8x1xf32>
    %13 = vector.broadcast %12 : vector<2x8x1xf32> to vector<2x8x8xf32>
    %14 = arith.subf %10, %13 : vector<2x8x8xf32>
    %15 = math.exp %14 : vector<2x8x8xf32>
    %cst_12 = arith.constant dense<0.000000e+00> : vector<2x8xf32>
    %16 = vector.multi_reduction <add>, %15, %cst_12 [2] : vector<2x8x8xf32> to vector<2x8xf32>
    %17 = vector.shape_cast %16 : vector<2x8xf32> to vector<2x8x1xf32>
    %18 = math.log %17 : vector<2x8x1xf32>
    %19 = arith.addf %12, %18 : vector<2x8x1xf32>
    %20 = vector.broadcast %19 : vector<2x8x1xf32> to vector<2x8x8xf32>
    %21 = arith.subf %10, %20 : vector<2x8x8xf32>
    %c0_13 = arith.constant 0 : index
    %c0_14 = arith.constant 0 : index
    %c0_15 = arith.constant 0 : index
    %22 = vector.load %arg4[%c0_13, %c0_14, %c0_15] : memref<2x8x8xf32, #tpu.memory_space<vmem>>, vector<2x8x8xf32>
    tpu.vector_store %arg4[%c0_13, %c0_14, %c0_15], %21 {strides = array<i32>} : memref<2x8x8xf32, #tpu.memory_space<vmem>>, vector<2x8x8xf32>,
    return
  }
}

</mosaic_0001>

<llo_original>
// kernel: tpu_custom_call.1
$region0: #{tpu_custom_call.1}
  #allocation0 [shape = 'u32[]', space=smem, size = 0x4, offset = 0x4, fixed_abs, tag = 'smem constant byte address 0x4 - core index']
  #allocation1 [shape = 'u32[144,128]{1,0:T(1,128)}', space=vmem, size = 0x12000, scoped, tag = 'internal scratch']
  %s0 = inlined_call_operand.hbm [shape: f32[2,8,32], index: 0, kind: input, shape index: {}]
  %s1 = inlined_call_operand.hbm [shape: f32[2,8,32], index: 1, kind: input, shape index: {}]
  %s2 = inlined_call_operand.hbm [shape: f32[32,32], index: 2, kind: input, shape index: {}]
  %s3 = inlined_call_operand.vmem [shape: f32[1,1,32], index: 3, kind: input, shape index: {}]
  %s4 = inlined_call_operand.hbm [shape: f32[2,8,8], index: 4, kind: output, shape index: {}]
  %s5 = sld [smem:[#allocation0]]
  $region38: #{tpu_custom_call.1} parent=0
    _
  %s7 = ssub.s32 1, %s5
  %s8 = scalar_select 0, %s7, %s5
  $region1: #{tpu_custom_call.1} parent=0
    #allocation2 [shape = 'u8[8192]{0}', space=vmem, size = 0x2000, scoped, tag = 'input window, operand 0, single buffered']
    #allocation3 [shape = 's32[1]{0}', space=sflag, size = 0x4, scoped, tag = 'scoped memory for tpu_custom_call.1']
    #allocation4 [shape = 's32[1]{0}', space=sflag, size = 0x4, scoped, tag = 'scoped memory for tpu_custom_call.1']
    #allocation5 [shape = 'u8[8192]{0}', space=vmem, size = 0x2000, scoped, tag = 'input window, operand 1, single buffered']
    #allocation6 [shape = 's32[1]{0}', space=sflag, size = 0x4, scoped, tag = 'scoped memory for tpu_custom_call.1']
    #allocation7 [shape = 'u8[16384]{0}', space=vmem, size = 0x4000, scoped, tag = 'input window, operand 2, single buffered']
    #allocation8 [shape = 'u8[8192]{0}', space=vmem, size = 0x2000, scoped, tag = 'output window, operand 0, single buffered']
    %9 = vsyncpa [#allocation3], 0
    %10 = vsyncpa [#allocation6], 0
    %11 = vsyncpa [#allocation4], 0
    // Predicated region
    $region2: #{tpu_custom_call.1} parent=1 // pred_check
      _
    $region3: #{tpu_custom_call.1} parent=1 // pred_check_branch
      %13 = sbr.rel (0) target = $region5
    $region4: #{tpu_custom_call.1} parent=1 // pred_region
      %s15 = ssub.s32 256, 256
      %16 = vsyncadd [#allocation3], %s15
      %s17 = sshll.u32 [#allocation2], 4
      %s18 = int_to_ptr.vmem [resolvable:$true] %s17
      %23 = dma.hbm_to_vmem [thread:$0]  %s0, 256, %s18, [#allocation3], 128, 128, 8
    $region5: #{tpu_custom_call.1} parent=1 // pred_fallthru
      _
    // Predicated region
    $region6: #{tpu_custom_call.1} parent=1 // pred_check
      _
    $region7: #{tpu_custom_call.1} parent=1 // pred_check_branch
      %25 = sbr.rel (0) target = $region9
    $region8: #{tpu_custom_call.1} parent=1 // pred_region
      %s27 = ssub.s32 256, 256
      %28 = vsyncadd [#allocation6], %s27
      %s29 = sshll.u32 [#allocation5], 4
      %s30 = int_to_ptr.vmem [resolvable:$true] %s29
      %35 = dma.hbm_to_vmem [thread:$0]  %s1, 256, %s30, [#allocation6], 128, 128, 8
    $region9: #{tpu_custom_call.1} parent=1 // pred_fallthru
      _
    // Predicated region
    $region10: #{tpu_custom_call.1} parent=1 // pred_check
      _
    $region11: #{tpu_custom_call.1} parent=1 // pred_check_branch
      %37 = sbr.rel (0) target = $region13
    $region12: #{tpu_custom_call.1} parent=1 // pred_region
      %s39 = ssub.s32 512, 512
      %40 = vsyncadd [#allocation6], %s39
      %s41 = sshll.u32 [#allocation7], 4
      %s42 = int_to_ptr.vmem [resolvable:$true] %s41
      %47 = dma.hbm_to_vmem [thread:$0]  %s2, 512, %s42, [#allocation6], 128, 128, 8
    $region13: #{tpu_custom_call.1} parent=1 // pred_fallthru
      _
    // Predicated region
    $region14: #{tpu_custom_call.1} parent=1 // pred_check
      _
    $region15: #{tpu_custom_call.1} parent=1 // pred_check_branch
      %49 = sbr.rel (0) target = $region17
    $region16: #{tpu_custom_call.1} parent=1 // pred_region
      _
    $region17: #{tpu_custom_call.1} parent=1 // pred_fallthru
      _
    // Predicated region
    $region18: #{tpu_custom_call.1} parent=1 // pred_check
      _
    $region19: #{tpu_custom_call.1} parent=1 // pred_check_branch
      %51 = sbr.rel (0) target = $region21
    $region20: #{tpu_custom_call.1} parent=1 // pred_region
      %52 = dma.done [#allocation3], 256
    $region21: #{tpu_custom_call.1} parent=1 // pred_fallthru
      _
    // Predicated region
    $region22: #{tpu_custom_call.1} parent=1 // pred_check
      _
    $region23: #{tpu_custom_call.1} parent=1 // pred_check_branch
      %54 = sbr.rel (0) target = $region25
    $region24: #{tpu_custom_call.1} parent=1 // pred_region
      %55 = dma.done [#allocation6], 256
    $region25: #{tpu_custom_call.1} parent=1 // pred_fallthru
      _
    // Predicated region
    $region26: #{tpu_custom_call.1} parent=1 // pred_check
      _
    $region27: #{tpu_custom_call.1} parent=1 // pred_check_branch
      %57 = sbr.rel (0) target = $region29
    $region28: #{tpu_custom_call.1} parent=1 // pred_region
      %58 = dma.done [#allocation6], 512
    $region29: #{tpu_custom_call.1} parent=1 // pred_fallthru
      _
    %v59 = vld [vmem:[#allocation2] sm:$0xff]
    %v60 = vld [vmem:[#allocation2 + $0x8] sm:$0xff]
    %v61 = vld [vmem:[#allocation5] sm:$0xff]
    %v62 = vld [vmem:[#allocation5 + $0x8] sm:$0xff]
    %v63 = vld [vmem:[#allocation7] sm:$0xff]
    %v64 = vld [vmem:[#allocation7 + $0x8] sm:$0xff]
    %v65 = vld [vmem:[#allocation7 + $0x10] sm:$0xff]
    %v66 = vld [vmem:[#allocation7 + $0x18] sm:$0xff]
    %v67 = vld [vmem:[%s3] sm:$0x1]
    %v69 = vlaneseq
    %v70 = vshrl.u32 %v69, 7
    %v71 = vsub.s32 0, %v70
    %v72 = vrot.slane %v67, %v71
    %vm74 = vcmask 261120
    %v76 = vsel %vm74, %v61, 0
    %v79 = vsel %vm74, %v63, 0
    %v82 = vsel %vm74, %v64, 0
    %v85 = vsel %vm74, %v65, 0
    %v88 = vsel %vm74, %v66, 0
    %90 = vmatprep.subr.mxu0 0.0
    %91 = vmatpush1.xpose.msra.mxu0 %v79
    %92 = vmatprep.subr.mxu0 0.0
    %93 = vmatpush1.xpose.msra.mxu0 %v82
    %94 = vmatprep.subr.mxu0 0.0
    %95 = vmatpush1.xpose.msra.mxu0 %v85
    %96 = vmatprep.subr.mxu0 0.0
    %97 = vmatpush1.xpose.msra.mxu0 %v88
    %98 = vmatprep.subr.mxu0 0.0
    %99 = vmatpush1.xpose.msra.mxu0 0.0
    %100 = vmatprep.subr.mxu0 0.0
    %101 = vmatpush1.xpose.msra.mxu0 0.0
    %102 = vmatprep.subr.mxu0 0.0
    %103 = vmatpush1.xpose.msra.mxu0 0.0
    %104 = vmatprep.subr.mxu0 0.0
    %105 = vmatpush1.xpose.msra.mxu0 0.0
    %106 = vmatprep.subr.mxu0 0.0
    %107 = vmatpush1.xpose.msra.mxu0 0.0
    %108 = vmatprep.subr.mxu0 0.0
    %109 = vmatpush1.xpose.msra.mxu0 0.0
    %110 = vmatprep.subr.mxu0 0.0
    %111 = vmatpush1.xpose.msra.mxu0 0.0
    %112 = vmatprep.subr.mxu0 0.0
    %113 = vmatpush1.xpose.msra.mxu0 0.0
    %114 = vmatprep.subr.mxu0 0.0
    %115 = vmatpush1.xpose.msra.mxu0 0.0
    %116 = vmatprep.subr.mxu0 0.0
    %117 = vmatpush1.xpose.msra.mxu0 0.0
    %118 = vmatprep.subr.mxu0 0.0
    %119 = vmatpush1.xpose.msra.mxu0 0.0
    %120 = vmatprep.subr.mxu0 0.0
    %121 = vmatpush1.xpose.msra.mxu0 0.0
    %122 = vmatprep.subr.mxu0 0.0
    %123 = vmatpush1.xpose.msra.mxu0 0.0
    %124 = vmatprep.subr.mxu0 0.0
    %125 = vmatpush1.xpose.msra.mxu0 0.0
    %126 = vmatprep.subr.mxu0 0.0
    %127 = vmatpush1.xpose.msra.mxu0 0.0
    %128 = vmatprep.subr.mxu0 0.0
    %129 = vmatpush1.xpose.msra.mxu0 0.0
    %130 = vmatprep.subr.mxu0 0.0
    %131 = vmatpush1.xpose.msra.mxu0 0.0
    %132 = vmatprep.subr.mxu0 0.0
    %133 = vmatpush1.xpose.msra.mxu0 0.0
    %134 = vmatprep.subr.mxu0 0.0
    %135 = vmatpush1.xpose.msra.mxu0 0.0
    %136 = vmatprep.subr.mxu0 0.0
    %137 = vmatpush1.xpose.msra.mxu0 0.0
    %138 = vmatprep.subr.mxu0 0.0
    %139 = vmatpush1.xpose.msra.mxu0 0.0
    %140 = vmatprep.subr.mxu0 0.0
    %141 = vmatpush1.xpose.msra.mxu0 0.0
    %142 = vmatprep.subr.mxu0 0.0
    %143 = vmatpush1.xpose.msra.mxu0 0.0
    %144 = vmatprep.subr.mxu0 0.0
    %145 = vmatpush1.xpose.msra.mxu0 0.0
    %146 = vmatprep.subr.mxu0 0.0
    %147 = vmatpush1.xpose.msra.mxu0 0.0
    %148 = vmatprep.subr.mxu0 0.0
    %149 = vmatpush1.xpose.msra.mxu0 0.0
    %150 = vmatprep.subr.mxu0 0.0
    %151 = vmatpush1.xpose.msra.mxu0 0.0
    %152 = vmatprep.subr.mxu0 0.0
    %153 = vmatpush1.xpose.msra.mxu0 0.0
    %154 = vmatprep.mubr.f32.mxu0 0.0
    %155 = vmatmul.mubr.f32.gmra.mrb[0].mxu0 %v76
    %v156 = vpop.f32.mrb[0].mxu0
    %v157 = vadd.f32 %v72, %v156
    %v158 = vpop.f32.mrb[0].mxu0
    %159 = vdwg.mxu0
    %v161 = vsel %vm74, %v62, 0
    %163 = vmatprep.subr.mxu0 0.0
    %164 = vmatpush1.xpose.msra.mxu0 %v79
    %165 = vmatprep.subr.mxu0 0.0
    %166 = vmatpush1.xpose.msra.mxu0 %v82
    %167 = vmatprep.subr.mxu0 0.0
    %168 = vmatpush1.xpose.msra.mxu0 %v85
    %169 = vmatprep.subr.mxu0 0.0
    %170 = vmatpush1.xpose.msra.mxu0 %v88
    %171 = vmatprep.subr.mxu0 0.0
    %172 = vmatpush1.xpose.msra.mxu0 0.0
    %173 = vmatprep.subr.mxu0 0.0
    %174 = vmatpush1.xpose.msra.mxu0 0.0
    %175 = vmatprep.subr.mxu0 0.0
    %176 = vmatpush1.xpose.msra.mxu0 0.0
    %177 = vmatprep.subr.mxu0 0.0
    %178 = vmatpush1.xpose.msra.mxu0 0.0
    %179 = vmatprep.subr.mxu0 0.0
    %180 = vmatpush1.xpose.msra.mxu0 0.0
    %181 = vmatprep.subr.mxu0 0.0
    %182 = vmatpush1.xpose.msra.mxu0 0.0
    %183 = vmatprep.subr.mxu0 0.0
    %184 = vmatpush1.xpose.msra.mxu0 0.0
    %185 = vmatprep.subr.mxu0 0.0
    %186 = vmatpush1.xpose.msra.mxu0 0.0
    %187 = vmatprep.subr.mxu0 0.0
    %188 = vmatpush1.xpose.msra.mxu0 0.0
    %189 = vmatprep.subr.mxu0 0.0
    %190 = vmatpush1.xpose.msra.mxu0 0.0
    %191 = vmatprep.subr.mxu0 0.0
    %192 = vmatpush1.xpose.msra.mxu0 0.0
    %193 = vmatprep.subr.mxu0 0.0
    %194 = vmatpush1.xpose.msra.mxu0 0.0
    %195 = vmatprep.subr.mxu0 0.0
    %196 = vmatpush1.xpose.msra.mxu0 0.0
    %197 = vmatprep.subr.mxu0 0.0
    %198 = vmatpush1.xpose.msra.mxu0 0.0
    %199 = vmatprep.subr.mxu0 0.0
    %200 = vmatpush1.xpose.msra.mxu0 0.0
    %201 = vmatprep.subr.mxu0 0.0
    %202 = vmatpush1.xpose.msra.mxu0 0.0
    %203 = vmatprep.subr.mxu0 0.0
    %204 = vmatpush1.xpose.msra.mxu0 0.0
    %205 = vmatprep.subr.mxu0 0.0
    %206 = vmatpush1.xpose.msra.mxu0 0.0
    %207 = vmatprep.subr.mxu0 0.0
    %208 = vmatpush1.xpose.msra.mxu0 0.0
    %209 = vmatprep.subr.mxu0 0.0
    %210 = vmatpush1.xpose.msra.mxu0 0.0
    %211 = vmatprep.subr.mxu0 0.0
    %212 = vmatpush1.xpose.msra.mxu0 0.0
    %213 = vmatprep.subr.mxu0 0.0
    %214 = vmatpush1.xpose.msra.mxu0 0.0
    %215 = vmatprep.subr.mxu0 0.0
    %216 = vmatpush1.xpose.msra.mxu0 0.0
    %217 = vmatprep.subr.mxu0 0.0
    %218 = vmatpush1.xpose.msra.mxu0 0.0
    %219 = vmatprep.subr.mxu0 0.0
    %220 = vmatpush1.xpose.msra.mxu0 0.0
    %221 = vmatprep.subr.mxu0 0.0
    %222 = vmatpush1.xpose.msra.mxu0 0.0
    %223 = vmatprep.subr.mxu0 0.0
    %224 = vmatpush1.xpose.msra.mxu0 0.0
    %225 = vmatprep.subr.mxu0 0.0
    %226 = vmatpush1.xpose.msra.mxu0 0.0
    %227 = vmatprep.mubr.f32.mxu0 0.0
    %228 = vmatmul.mubr.f32.gmra.mrb[0].mxu0 %v161
    %v229 = vpop.f32.mrb[0].mxu0
    %v230 = vadd.f32 %v72, %v229
    %v231 = vpop.f32.mrb[0].mxu0
    %232 = vdwg.mxu0
    %v234 = vsel %vm74, %v59, 0
    %v237 = vsel %vm74, %v157, 0
    %239 = vmatprep.subr.mxu0 0.0
    %240 = vmatpush1.xpose.msra.mxu0 %v237
    %241 = vmatprep.subr.mxu0 0.0
    %242 = vmatpush1.xpose.msra.mxu0 0.0
    %243 = vmatprep.subr.mxu0 0.0
    %244 = vmatpush1.xpose.msra.mxu0 0.0
    %245 = vmatprep.subr.mxu0 0.0
    %246 = vmatpush1.xpose.msra.mxu0 0.0
    %247 = vmatprep.subr.mxu0 0.0
    %248 = vmatpush1.xpose.msra.mxu0 0.0
    %249 = vmatprep.subr.mxu0 0.0
    %250 = vmatpush1.xpose.msra.mxu0 0.0
    %251 = vmatprep.subr.mxu0 0.0
    %252 = vmatpush1.xpose.msra.mxu0 0.0
    %253 = vmatprep.subr.mxu0 0.0
    %254 = vmatpush1.xpose.msra.mxu0 0.0
    %255 = vmatprep.subr.mxu0 0.0
    %256 = vmatpush1.xpose.msra.mxu0 0.0
    %257 = vmatprep.subr.mxu0 0.0
    %258 = vmatpush1.xpose.msra.mxu0 0.0
    %259 = vmatprep.subr.mxu0 0.0
    %260 = vmatpush1.xpose.msra.mxu0 0.0
    %261 = vmatprep.subr.mxu0 0.0
    %262 = vmatpush1.xpose.msra.mxu0 0.0
    %263 = vmatprep.subr.mxu0 0.0
    %264 = vmatpush1.xpose.msra.mxu0 0.0
    %265 = vmatprep.subr.mxu0 0.0
    %266 = vmatpush1.xpose.msra.mxu0 0.0
    %267 = vmatprep.subr.mxu0 0.0
    %268 = vmatpush1.xpose.msra.mxu0 0.0
    %269 = vmatprep.subr.mxu0 0.0
    %270 = vmatpush1.xpose.msra.mxu0 0.0
    %271 = vmatprep.subr.mxu0 0.0
    %272 = vmatpush1.xpose.msra.mxu0 0.0
    %273 = vmatprep.subr.mxu0 0.0
    %274 = vmatpush1.xpose.msra.mxu0 0.0
    %275 = vmatprep.subr.mxu0 0.0
    %276 = vmatpush1.xpose.msra.mxu0 0.0
    %277 = vmatprep.subr.mxu0 0.0
    %278 = vmatpush1.xpose.msra.mxu0 0.0
    %279 = vmatprep.subr.mxu0 0.0
    %280 = vmatpush1.xpose.msra.mxu0 0.0
    %281 = vmatprep.subr.mxu0 0.0
    %282 = vmatpush1.xpose.msra.mxu0 0.0
    %283 = vmatprep.subr.mxu0 0.0
    %284 = vmatpush1.xpose.msra.mxu0 0.0
    %285 = vmatprep.subr.mxu0 0.0
    %286 = vmatpush1.xpose.msra.mxu0 0.0
    %287 = vmatprep.subr.mxu0 0.0
    %288 = vmatpush1.xpose.msra.mxu0 0.0
    %289 = vmatprep.subr.mxu0 0.0
    %290 = vmatpush1.xpose.msra.mxu0 0.0
    %291 = vmatprep.subr.mxu0 0.0
    %292 = vmatpush1.xpose.msra.mxu0 0.0
    %293 = vmatprep.subr.mxu0 0.0
    %294 = vmatpush1.xpose.msra.mxu0 0.0
    %295 = vmatprep.subr.mxu0 0.0
    %296 = vmatpush1.xpose.msra.mxu0 0.0
    %297 = vmatprep.subr.mxu0 0.0
    %298 = vmatpush1.xpose.msra.mxu0 0.0
    %299 = vmatprep.subr.mxu0 0.0
    %300 = vmatpush1.xpose.msra.mxu0 0.0
    %301 = vmatprep.subr.mxu0 0.0
    %302 = vmatpush1.xpose.msra.mxu0 0.0
    %303 = vmatprep.mubr.f32.mxu0 0.0
    %304 = vmatmul.mubr.f32.gmra.mrb[0].mxu0 %v234
    %v305 = vpop.f32.mrb[0].mxu0
    %v306 = vadd.f32 0.0, %v305
    %v307 = vpop.f32.mrb[0].mxu0
    %308 = vdwg.mxu0
    %v310 = vsel %vm74, %v60, 0
    %v313 = vsel %vm74, %v230, 0
    %315 = vmatprep.subr.mxu0 0.0
    %316 = vmatpush1.xpose.msra.mxu0 %v313
    %317 = vmatprep.subr.mxu0 0.0
    %318 = vmatpush1.xpose.msra.mxu0 0.0
    %319 = vmatprep.subr.mxu0 0.0
    %320 = vmatpush1.xpose.msra.mxu0 0.0
    %321 = vmatprep.subr.mxu0 0.0
    %322 = vmatpush1.xpose.msra.mxu0 0.0
    %323 = vmatprep.subr.mxu0 0.0
    %324 = vmatpush1.xpose.msra.mxu0 0.0
    %325 = vmatprep.subr.mxu0 0.0
    %326 = vmatpush1.xpose.msra.mxu0 0.0
    %327 = vmatprep.subr.mxu0 0.0
    %328 = vmatpush1.xpose.msra.mxu0 0.0
    %329 = vmatprep.subr.mxu0 0.0
    %330 = vmatpush1.xpose.msra.mxu0 0.0
    %331 = vmatprep.subr.mxu0 0.0
    %332 = vmatpush1.xpose.msra.mxu0 0.0
    %333 = vmatprep.subr.mxu0 0.0
    %334 = vmatpush1.xpose.msra.mxu0 0.0
    %335 = vmatprep.subr.mxu0 0.0
    %336 = vmatpush1.xpose.msra.mxu0 0.0
    %337 = vmatprep.subr.mxu0 0.0
    %338 = vmatpush1.xpose.msra.mxu0 0.0
    %339 = vmatprep.subr.mxu0 0.0
    %340 = vmatpush1.xpose.msra.mxu0 0.0
    %341 = vmatprep.subr.mxu0 0.0
    %342 = vmatpush1.xpose.msra.mxu0 0.0
    %343 = vmatprep.subr.mxu0 0.0
    %344 = vmatpush1.xpose.msra.mxu0 0.0
    %345 = vmatprep.subr.mxu0 0.0
    %346 = vmatpush1.xpose.msra.mxu0 0.0
    %347 = vmatprep.subr.mxu0 0.0
    %348 = vmatpush1.xpose.msra.mxu0 0.0
    %349 = vmatprep.subr.mxu0 0.0
    %350 = vmatpush1.xpose.msra.mxu0 0.0
    %351 = vmatprep.subr.mxu0 0.0
    %352 = vmatpush1.xpose.msra.mxu0 0.0
    %353 = vmatprep.subr.mxu0 0.0
    %354 = vmatpush1.xpose.msra.mxu0 0.0
    %355 = vmatprep.subr.mxu0 0.0
    %356 = vmatpush1.xpose.msra.mxu0 0.0
    %357 = vmatprep.subr.mxu0 0.0
    %358 = vmatpush1.xpose.msra.mxu0 0.0
    %359 = vmatprep.subr.mxu0 0.0
    %360 = vmatpush1.xpose.msra.mxu0 0.0
    %361 = vmatprep.subr.mxu0 0.0
    %362 = vmatpush1.xpose.msra.mxu0 0.0
    %363 = vmatprep.subr.mxu0 0.0
    %364 = vmatpush1.xpose.msra.mxu0 0.0
    %365 = vmatprep.subr.mxu0 0.0
    %366 = vmatpush1.xpose.msra.mxu0 0.0
    %367 = vmatprep.subr.mxu0 0.0
    %368 = vmatpush1.xpose.msra.mxu0 0.0
    %369 = vmatprep.subr.mxu0 0.0
    %370 = vmatpush1.xpose.msra.mxu0 0.0
    %371 = vmatprep.subr.mxu0 0.0
    %372 = vmatpush1.xpose.msra.mxu0 0.0
    %373 = vmatprep.subr.mxu0 0.0
    %374 = vmatpush1.xpose.msra.mxu0 0.0
    %375 = vmatprep.subr.mxu0 0.0
    %376 = vmatpush1.xpose.msra.mxu0 0.0
    %377 = vmatprep.subr.mxu0 0.0
    %378 = vmatpush1.xpose.msra.mxu0 0.0
    %379 = vmatprep.mubr.f32.mxu0 0.0
    %380 = vmatmul.mubr.f32.gmra.mrb[0].mxu0 %v310
    %v381 = vpop.f32.mrb[0].mxu0
    %v382 = vadd.f32 0.0, %v381
    %v383 = vpop.f32.mrb[0].mxu0
    %384 = vdwg.mxu0
    %v385 = vmul.f32 %v306, 1.442695
    %v386 = vpow.pop %v385
    %v387 = vmul.f32 %v382, 1.442695
    %v388 = vpow.pop %v387
    %vm389 = vcmask 64512
    %v390 = vsel %vm389, %v386, -inf
    %391 = vmax.xlane.f32.xlu0 %v390
    %v392 = vpop.xlane.xlu0 %391
    %v393 = vsel %vm389, %v388, -inf
    %394 = vmax.xlane.f32.xlu0 %v393
    %v395 = vpop.xlane.xlu0 %394
    %v396 = vsub.f32 %v386, %v392
    %v397 = vsub.f32 %v388, %v395
    %v398 = vmul.f32 %v396, 1.442695
    %v399 = vpow.pop %v398
    %v400 = vmul.f32 %v397, 1.442695
    %v401 = vpow.pop %v400
    %v402 = vsel %vm389, %v399, 0.0
    %403 = vadd.xlane.f32.xlu0 %v402
    %v404 = vpop.xlane.xlu0 %403
    %v405 = vsel %vm389, %v401, 0.0
    %406 = vadd.xlane.f32.xlu0 %v405
    %v407 = vpop.xlane.xlu0 %406
    %v408 = vlog2.pop %v404
    %v409 = vmul.f32 %v408, 0.6931472
    %v410 = vlog2.pop %v407
    %v411 = vmul.f32 %v410, 0.6931472
    %v412 = vadd.f32 %v392, %v409
    %v413 = vadd.f32 %v395, %v411
    %v414 = vsub.f32 %v386, %v412
    %v415 = vsub.f32 %v388, %v413
    %416 = vst.msk [vmem:[#allocation8] sm:$0xff] %vm389, %v414
    %417 = vst.msk [vmem:[#allocation8 + $0x8] sm:$0xff] %vm389, %v415
    // Predicated region
    $region30: #{tpu_custom_call.1} parent=1 // pred_check
      _
    $region31: #{tpu_custom_call.1} parent=1 // pred_check_branch
      %419 = sbr.rel (0) target = $region33
    $region32: #{tpu_custom_call.1} parent=1 // pred_region
      %s421 = ssub.s32 256, 256
      %422 = vsyncadd [#allocation4], %s421
      %s423 = sshll.u32 [#allocation8], 4
      %s424 = int_to_ptr.vmem [resolvable:$true] %s423
      %429 = dma.vmem_to_hbm [thread:$0]  %s424, 256, %s4, [#allocation4], 128, 128, 8
    $region33: #{tpu_custom_call.1} parent=1 // pred_fallthru
      _
    // Predicated region
    $region34: #{tpu_custom_call.1} parent=1 // pred_check
      _
    $region35: #{tpu_custom_call.1} parent=1 // pred_check_branch
      %431 = sbr.rel (0) target = $region37
    $region36: #{tpu_custom_call.1} parent=1 // pred_region
      %432 = dma.done [#allocation4], 256
    $region37: #{tpu_custom_call.1} parent=1 // pred_fallthru
      _
    %433 = vsyncpa [#allocation3], 1
    %434 = vsyncpa [#allocation6], 1
    %435 = vsyncpa [#allocation4], 1

</llo_original>
